<compile_context>
chip_gen: v6e
topology: v6e:2x2x1
jax: 0.10.0
libtpu: 0.0.40
codegen_flags: <defaults>
</compile_context>

<pallas_src>
import functools

import jax
import jax.numpy as jnp
from jax.experimental import pallas as pl
from jax.experimental.pallas import tpu as pltpu

N_PAD = 128                # lane-aligned internal width for every feature dimension
PACKED_ROWS = 3 * N_PAD    # 3 fused weight+bias slabs; exactly (8,128)/(16,128) aligned


def _cdiv(a, b):
    return -(-a // b)


def _round_up(a, b):
    return _cdiv(a, b) * b


def dqn_kernel(x_ref, p_ref, o_ref, xw_ref):
    # x_ref : (TB, obs_space)  bf16 activation tile (unpadded lanes)
    # p_ref : (384, 128)       bf16 packed params, biases folded via constant-1 lane
    # o_ref : (TB, num_actions) f32 Q-values
    # xw_ref: (TB, 128)        bf16 VMEM scratch used to widen x to 128 lanes
    tb, obs = x_ref.shape

    # Widen x inside VMEM: lanes [0,obs) = x, lane 127 = 1.0 (carries the folded
    # biases), every other lane exactly 0.
    lane = jax.lax.broadcasted_iota(jnp.int32, (tb, N_PAD), 1)
    xw_ref[...] = (lane == N_PAD - 1).astype(xw_ref.dtype)
    xw_ref[:, 0:obs] = x_ref[...]
    x_wide = xw_ref[...]

    w1 = p_ref[0:N_PAD, :]
    w2 = p_ref[N_PAD:2 * N_PAD, :]
    w3 = p_ref[2 * N_PAD:3 * N_PAD, :]

    # bf16 MXU operands, f32 accumulation; bias-adds ride the matmul through the
    # constant lane; ReLU runs on the f32 accumulator (no bf16 VALU on v5e).
    h1 = jnp.maximum(jnp.dot(x_wide, w1, preferred_element_type=jnp.float32), 0.0)
    h2 = jnp.maximum(
        jnp.dot(h1.astype(w2.dtype), w2, preferred_element_type=jnp.float32), 0.0)
    out = jnp.dot(h2.astype(w3.dtype), w3, preferred_element_type=jnp.float32)

    o_ref[...] = out[:, : o_ref.shape[-1]].astype(o_ref.dtype)


def init_params(key, obs_space, num_actions, hidden=24):
    """PyTorch nn.Linear default init: U(-1/sqrt(fan_in), +1/sqrt(fan_in)).
    Weights stored [in_features, out_features] so forward is x @ W + b."""
    def linear(k, fan_in, fan_out):
        kw, kb = jax.random.split(k)
        bound = 1.0 / jnp.sqrt(jnp.float32(fan_in))
        w = jax.random.uniform(kw, (fan_in, fan_out), jnp.float32, -bound, bound)
        b = jax.random.uniform(kb, (fan_out,), jnp.float32, -bound, bound)
        return w, b

    k1, k2, k3 = jax.random.split(key, 3)
    w1, b1 = linear(k1, obs_space, hidden)
    w2, b2 = linear(k2, hidden, hidden)
    w3, b3 = linear(k3, hidden, num_actions)
    return dict(w1=w1, b1=b1, w2=w2, b2=b2, w3=w3, b3=b3)


def pack_params(p):
    """Pack the 3 layers into one (384, 128) bf16 buffer with biases folded via the
    constant-1 lane (lane 127):
      rows [L*128, L*128+fan_in)            : W_L  (cols [0, fan_out))
      row   L*128 + 127, cols [0, fan_out)  : b_L
      row   L*128 + 127, col  127           : 1.0 for L in {0,1} (keeps the constant
                                              lane alive through ReLU into layer L+1)
    Everything else is exactly 0, so unused hidden lanes stay 0 through ReLU."""
    def slab(w, b, keep_alive):
        fan_in, fan_out = w.shape
        assert fan_in < N_PAD - 1 and fan_out < N_PAD - 1
        s = jnp.zeros((N_PAD, N_PAD), jnp.float32)
        s = s.at[:fan_in, :fan_out].set(w.astype(jnp.float32))
        s = s.at[N_PAD - 1, :fan_out].set(b.astype(jnp.float32))
        if keep_alive:
            s = s.at[N_PAD - 1, N_PAD - 1].set(1.0)
        return s

    packed = jnp.concatenate(
        [slab(p["w1"], p["b1"], True),
         slab(p["w2"], p["b2"], True),
         slab(p["w3"], p["b3"], False)],
        axis=0,
    )
    return packed.astype(jnp.bfloat16)   # (384, 128)


@functools.partial(jax.jit, static_argnames=("num_actions", "batch_tile"))
def dqn_forward(x, packed_params, *, num_actions, batch_tile=2048):
    """x: [batch, obs_space] float. packed_params: (384,128) bf16 from pack_params().
    Returns [batch, num_actions] f32 Q-values."""
    batch, obs_space = x.shape

    # bf16-tile-aligned batch tile; split into >=2 grid steps once the batch is big
    # enough so both v7x TensorCores get work, then rebalance to minimize padding.
    tb = min(batch_tile, max(16, _round_up(_cdiv(batch, 2), 16)))
    grid = _cdiv(batch, tb)
    tb = _round_up(_cdiv(batch, grid), 16)
    batch_pad = grid * tb

    xb = x.astype(jnp.bfloat16)
    if batch_pad != batch:
        xb = jnp.pad(xb, ((0, batch_pad - batch), (0, 0)))   # only obs_space lanes wide

    cost = pl.CostEstimate(
        flops=2 * 3 * batch_pad * N_PAD * N_PAD,             # MXU work actually issued
        transcendentals=0,
        bytes_accessed=(batch_pad * obs_space * 2             # x (bf16)
                        + PACKED_ROWS * N_PAD * 2             # packed params (once)
                        + batch_pad * num_actions * 4),       # out (f32)
    )

    out = pl.pallas_call(
        dqn_kernel,
        out_shape=jax.ShapeDtypeStruct((batch_pad, num_actions), jnp.float32),
        grid=(grid,),
        in_specs=[
            pl.BlockSpec((tb, obs_space), lambda i: (i, 0)),
            # Constant block index: packed params fetched once, VMEM-resident.
            pl.BlockSpec((PACKED_ROWS, N_PAD), lambda i: (0, 0)),
        ],
        out_specs=pl.BlockSpec((tb, num_actions), lambda i: (i, 0)),
        scratch_shapes=[pltpu.VMEM((tb, N_PAD), jnp.bfloat16)],
        compiler_params=pltpu.CompilerParams(dimension_semantics=("parallel",)),
        cost_estimate=cost,
    )(xb, packed_params)

    return out[:batch]


def dqn_reference(x, p):
    h1 = jnp.maximum(x @ p["w1"] + p["b1"], 0.0)
    h2 = jnp.maximum(h1 @ p["w2"] + p["b2"], 0.0)
    return h2 @ p["w3"] + p["b3"]


if __name__ == "__main__":
    obs_space = 4       # CartPole observation dim
    num_actions = 2     # CartPole action dim
    batch = 8

    key = jax.random.PRNGKey(0)
    kx, kp = jax.random.split(key)
    x = jax.random.normal(kx, (batch, obs_space), jnp.float32)
    params = init_params(kp, obs_space, num_actions)
    packed = pack_params(params)

    out = jax.block_until_ready(dqn_forward(x, packed, num_actions=num_actions))
    ref = dqn_reference(x, params)

    assert out.shape == (batch, num_actions), out.shape
    # bf16 weights/activations with f32 MXU accumulation vs. the f32 reference.
    assert jnp.allclose(out, ref, atol=3e-2, rtol=3e-2), (out, ref)
    print("KERNEL_OK")
</pallas_src>

<mosaic_0001>
module attributes {stable_mosaic.version = 11 : i64} {
  func.func @dqn_kernel(%arg0: i32, %arg1: memref<16x4xbf16, #tpu.memory_space<vmem>>, %arg2: memref<384x128xbf16, #tpu.memory_space<vmem>>, %arg3: memref<16x2xf32, #tpu.memory_space<vmem>>, %arg4: memref<16x128xbf16, #tpu.memory_space<vmem>>) attributes {dimension_semantics = [#tpu.dimension_semantics<parallel>], iteration_bounds = array<i64: 1>, scalar_prefetch = 0 : i64, scratch_operands = 1 : i64, tpu.core_type = #tpu.core_type<tc>, window_params = [{transform_indices = @transform_0, window_bounds = array<i64: 16, 4>}, {pipeline_mode = #tpu.pipeline_mode<synchronous>, transform_indices = @transform_1, window_bounds = array<i64: 384, 128>}, {transform_indices = @transform_2, window_bounds = array<i64: 16, 2>}]} {
    %0 = tpu.iota {dimensions = array<i32: 1>} : vector<16x128xi32>
    %c127_i32 = arith.constant 127 : i32
    %1 = vector.broadcast %c127_i32 : i32 to vector<16x128xi32>
    %2 = arith.cmpi eq, %0, %1 : vector<16x128xi32>
    %3 = arith.extui %2 : vector<16x128xi1> to vector<16x128xi32>
    %4 = arith.sitofp %3 : vector<16x128xi32> to vector<16x128xf32>
    %5 = arith.truncf %4 : vector<16x128xf32> to vector<16x128xbf16>
    %c0 = arith.constant 0 : index
    %c0_0 = arith.constant 0 : index
    %6 = vector.load %arg4[%c0, %c0_0] : memref<16x128xbf16, #tpu.memory_space<vmem>>, vector<16x128xbf16>
    tpu.vector_store %arg4[%c0, %c0_0], %5 {strides = array<i32>} : memref<16x128xbf16, #tpu.memory_space<vmem>>, vector<16x128xbf16>,
    %c0_1 = arith.constant 0 : index
    %c0_2 = arith.constant 0 : index
    %7 = vector.load %arg1[%c0_1, %c0_2] : memref<16x4xbf16, #tpu.memory_space<vmem>>, vector<16x4xbf16>
    %c0_3 = arith.constant 0 : index
    %c0_4 = arith.constant 0 : index
    %8 = vector.load %arg4[%c0_3, %c0_4] : memref<16x128xbf16, #tpu.memory_space<vmem>>, vector<16x4xbf16>
    tpu.vector_store %arg4[%c0_3, %c0_4], %7 {strides = array<i32>} : memref<16x128xbf16, #tpu.memory_space<vmem>>, vector<16x4xbf16>,
    %c0_5 = arith.constant 0 : index
    %c0_6 = arith.constant 0 : index
    %9 = vector.load %arg4[%c0_5, %c0_6] : memref<16x128xbf16, #tpu.memory_space<vmem>>, vector<16x128xbf16>
    %c0_7 = arith.constant 0 : index
    %c0_8 = arith.constant 0 : index
    %10 = vector.load %arg2[%c0_7, %c0_8] : memref<384x128xbf16, #tpu.memory_space<vmem>>, vector<128x128xbf16>
    %c128 = arith.constant 128 : index
    %c0_9 = arith.constant 0 : index
    %11 = vector.load %arg2[%c128, %c0_9] : memref<384x128xbf16, #tpu.memory_space<vmem>>, vector<128x128xbf16>
    %c256 = arith.constant 256 : index
    %c0_10 = arith.constant 0 : index
    %12 = vector.load %arg2[%c256, %c0_10] : memref<384x128xbf16, #tpu.memory_space<vmem>>, vector<128x128xbf16>
    %cst = arith.constant dense<0.000000e+00> : vector<16x128xf32>
    %13 = tpu.matmul %9, %10, %cst {dimension_numbers = #tpu.dot_dimension_numbers<[1], [0], [0], [1], [0, 0, 1, 1], [], []>} : vector<16x128xbf16>, vector<128x128xbf16>, vector<16x128xf32> -> vector<16x128xf32>
    %cst_11 = arith.constant 0.000000e+00 : f32
    %14 = vector.broadcast %cst_11 : f32 to vector<16x128xf32>
    %15 = arith.maximumf %13, %14 : vector<16x128xf32>
    %16 = arith.truncf %15 : vector<16x128xf32> to vector<16x128xbf16>
    %cst_12 = arith.constant dense<0.000000e+00> : vector<16x128xf32>
    %17 = tpu.matmul %16, %11, %cst_12 {dimension_numbers = #tpu.dot_dimension_numbers<[1], [0], [0], [1], [0, 0, 1, 1], [], []>} : vector<16x128xbf16>, vector<128x128xbf16>, vector<16x128xf32> -> vector<16x128xf32>
    %cst_13 = arith.constant 0.000000e+00 : f32
    %18 = vector.broadcast %cst_13 : f32 to vector<16x128xf32>
    %19 = arith.maximumf %17, %18 : vector<16x128xf32>
    %20 = arith.truncf %19 : vector<16x128xf32> to vector<16x128xbf16>
    %cst_14 = arith.constant dense<0.000000e+00> : vector<16x128xf32>
    %21 = tpu.matmul %20, %12, %cst_14 {dimension_numbers = #tpu.dot_dimension_numbers<[1], [0], [0], [1], [0, 0, 1, 1], [], []>} : vector<16x128xbf16>, vector<128x128xbf16>, vector<16x128xf32> -> vector<16x128xf32>
    %22 = vector.extract_strided_slice %21 {offsets = [0, 0], sizes = [16, 2], strides = [1, 1]} : vector<16x128xf32> to vector<16x2xf32>
    %c0_15 = arith.constant 0 : index
    %c0_16 = arith.constant 0 : index
    %23 = vector.load %arg3[%c0_15, %c0_16] : memref<16x2xf32, #tpu.memory_space<vmem>>, vector<16x2xf32>
    tpu.vector_store %arg3[%c0_15, %c0_16], %22 {strides = array<i32>} : memref<16x2xf32, #tpu.memory_space<vmem>>, vector<16x2xf32>,
    return
  }
  func.func @transform_0(%arg0: i32) -> (i32, i32) {
    %c0_i32 = arith.constant 0 : i32
    %c0_i32_0 = arith.constant 0 : i32
    return %arg0, %c0_i32 : i32, i32
  }
  func.func @transform_1(%arg0: i32) -> (i32, i32) {
    %c0_i32 = arith.constant 0 : i32
    %c0_i32_0 = arith.constant 0 : i32
    %c0_i32_1 = arith.constant 0 : i32
    return %c0_i32, %c0_i32_0 : i32, i32
  }
  func.func @transform_2(%arg0: i32) -> (i32, i32) {
    %c0_i32 = arith.constant 0 : i32
    %c0_i32_0 = arith.constant 0 : i32
    return %arg0, %c0_i32 : i32, i32
  }
}

</mosaic_0001>

<llo_original>
// kernel: dqn_forward.1
$region0: #{dqn_forward.1}
  #allocation0 [shape = 'u32[]', space=smem, size = 0x4, offset = 0x4, fixed_abs, tag = 'smem constant byte address 0x4 - core index']
  #allocation1 [shape = 'u32[144,128]{1,0:T(1,128)}', space=vmem, size = 0x12000, scoped, tag = 'internal scratch']
  #allocation2 [shape = 'bf16[16,128]{1,0:T(8,128)(2,1)}', space=vmem, size = 0x1000, scoped, tag = 'scratch operand']
  %s0 = inlined_call_operand.vmem [shape: bf16[16,4], index: 0, kind: input, shape index: {}]
  %s1 = inlined_call_operand.hbm [shape: bf16[384,128], index: 1, kind: input, shape index: {}]
  %s2 = inlined_call_operand.vmem [shape: f32[16,2], index: 2, kind: output, shape index: {}]
  %s3 = sld [smem:[#allocation0]]
  $region22: #{dqn_forward.1} parent=0
    _
  %s5 = ssub.s32 1, %s3
  %s6 = scalar_select 0, %s5, %s3
  $region1: #{dqn_forward.1} parent=0
    #allocation3 [shape = 'u8[98304]{0}', space=vmem, size = 0x18000, scoped, tag = 'input window, operand 1, single buffered']
    #allocation4 [shape = 's32[1]{0}', space=sflag, size = 0x4, scoped, tag = 'scoped memory for dqn_forward.1']
    %7 = vsyncpa [#allocation4], 0
    // Predicated region
    $region2: #{dqn_forward.1} parent=1 // pred_check
      _
    $region3: #{dqn_forward.1} parent=1 // pred_check_branch
      %9 = sbr.rel (0) target = $region5
    $region4: #{dqn_forward.1} parent=1 // pred_region
      _
    $region5: #{dqn_forward.1} parent=1 // pred_fallthru
      _
    // Predicated region
    $region6: #{dqn_forward.1} parent=1 // pred_check
      _
    $region7: #{dqn_forward.1} parent=1 // pred_check_branch
      %11 = sbr.rel (0) target = $region9
    $region8: #{dqn_forward.1} parent=1 // pred_region
      %s13 = ssub.s32 3072, 3072
      %14 = vsyncadd [#allocation4], %s13
      %s15 = sshll.u32 [#allocation3], 4
      %s16 = int_to_ptr.vmem [resolvable:$true] %s15
      %21 = dma.hbm_to_vmem [thread:$0]  %s1, 3072, %s16, [#allocation4], 64, 64, 4
    $region9: #{dqn_forward.1} parent=1 // pred_fallthru
      _
    // Predicated region
    $region10: #{dqn_forward.1} parent=1 // pred_check
      _
    $region11: #{dqn_forward.1} parent=1 // pred_check_branch
      %23 = sbr.rel (0) target = $region13
    $region12: #{dqn_forward.1} parent=1 // pred_region
      %24 = dma.done [#allocation4], 3072
    $region13: #{dqn_forward.1} parent=1 // pred_fallthru
      _
    %v26 = vlaneseq
    %v27 = vand.u32 %v26, 127
    %vm28 = vcmp.eq.s32.totalorder %v27, 127
    %v29 = vsel %vm28, 1, 0
    %v30 = vcvt.s32.f32 %v29
    %v31 = vpack.c.bf16 %v30, %v30
    %v33 = vunpack.c.l.b16 %v31
    %v34 = vpack.c.b16 %v33, %v33
    %36 = vst [vmem:[#allocation2] sm:$0xf] %v34
    %37 = vst [vmem:[#allocation2 + $0x4] sm:$0xf] %v34
    %v38 = vld [vmem:[%s0] sm:$0xf]
    %v39 = vld [vmem:[%s0 + $0x4] sm:$0xf]
    %vm40 = vcmask 27648
    %41 = vst.msk [vmem:[#allocation2] sm:$0xf] %vm40, %v38
    %42 = vst.msk [vmem:[#allocation2 + $0x4] sm:$0xf] %vm40, %v39
    %v43 = vld [vmem:[#allocation2] sm:$0xf]
    %v44 = vld [vmem:[#allocation2 + $0x4] sm:$0xf]
    %v45 = vld [vmem:[#allocation3] sm:$0xf]
    %v46 = vld [vmem:[#allocation3 + $0x4] sm:$0xf]
    %v47 = vld [vmem:[#allocation3 + $0x8] sm:$0xf]
    %v48 = vld [vmem:[#allocation3 + $0xc] sm:$0xf]
    %v49 = vld [vmem:[#allocation3 + $0x10] sm:$0xf]
    %v50 = vld [vmem:[#allocation3 + $0x14] sm:$0xf]
    %v51 = vld [vmem:[#allocation3 + $0x18] sm:$0xf]
    %v52 = vld [vmem:[#allocation3 + $0x1c] sm:$0xf]
    %v53 = vld [vmem:[#allocation3 + $0x20] sm:$0xf]
    %v54 = vld [vmem:[#allocation3 + $0x24] sm:$0xf]
    %v55 = vld [vmem:[#allocation3 + $0x28] sm:$0xf]
    %v56 = vld [vmem:[#allocation3 + $0x2c] sm:$0xf]
    %v57 = vld [vmem:[#allocation3 + $0x30] sm:$0xf]
    %v58 = vld [vmem:[#allocation3 + $0x34] sm:$0xf]
    %v59 = vld [vmem:[#allocation3 + $0x38] sm:$0xf]
    %v60 = vld [vmem:[#allocation3 + $0x3c] sm:$0xf]
    %v61 = vld [vmem:[#allocation3 + $0x40] sm:$0xf]
    %v62 = vld [vmem:[#allocation3 + $0x44] sm:$0xf]
    %v63 = vld [vmem:[#allocation3 + $0x48] sm:$0xf]
    %v64 = vld [vmem:[#allocation3 + $0x4c] sm:$0xf]
    %v65 = vld [vmem:[#allocation3 + $0x50] sm:$0xf]
    %v66 = vld [vmem:[#allocation3 + $0x54] sm:$0xf]
    %v67 = vld [vmem:[#allocation3 + $0x58] sm:$0xf]
    %v68 = vld [vmem:[#allocation3 + $0x5c] sm:$0xf]
    %v69 = vld [vmem:[#allocation3 + $0x60] sm:$0xf]
    %v70 = vld [vmem:[#allocation3 + $0x64] sm:$0xf]
    %v71 = vld [vmem:[#allocation3 + $0x68] sm:$0xf]
    %v72 = vld [vmem:[#allocation3 + $0x6c] sm:$0xf]
    %v73 = vld [vmem:[#allocation3 + $0x70] sm:$0xf]
    %v74 = vld [vmem:[#allocation3 + $0x74] sm:$0xf]
    %v75 = vld [vmem:[#allocation3 + $0x78] sm:$0xf]
    %v76 = vld [vmem:[#allocation3 + $0x7c] sm:$0xf]
    %v77 = vld [vmem:[#allocation3 + $0x80] sm:$0xf]
    %v78 = vld [vmem:[#allocation3 + $0x84] sm:$0xf]
    %v79 = vld [vmem:[#allocation3 + $0x88] sm:$0xf]
    %v80 = vld [vmem:[#allocation3 + $0x8c] sm:$0xf]
    %v81 = vld [vmem:[#allocation3 + $0x90] sm:$0xf]
    %v82 = vld [vmem:[#allocation3 + $0x94] sm:$0xf]
    %v83 = vld [vmem:[#allocation3 + $0x98] sm:$0xf]
    %v84 = vld [vmem:[#allocation3 + $0x9c] sm:$0xf]
    %v85 = vld [vmem:[#allocation3 + $0xa0] sm:$0xf]
    %v86 = vld [vmem:[#allocation3 + $0xa4] sm:$0xf]
    %v87 = vld [vmem:[#allocation3 + $0xa8] sm:$0xf]
    %v88 = vld [vmem:[#allocation3 + $0xac] sm:$0xf]
    %v89 = vld [vmem:[#allocation3 + $0xb0] sm:$0xf]
    %v90 = vld [vmem:[#allocation3 + $0xb4] sm:$0xf]
    %v91 = vld [vmem:[#allocation3 + $0xb8] sm:$0xf]
    %v92 = vld [vmem:[#allocation3 + $0xbc] sm:$0xf]
    %v95 = vunpack.c.l.b16 %v43
    %v96 = vunpack.c.l.b16 %v44
    %v97 = vpack.c.b16 %v96, %v95
    %v115 = vunpack.c.l.b16 %v45
    %v116 = vunpack.c.l.b16 %v46
    %v117 = vunpack.c.l.b16 %v47
    %v118 = vunpack.c.l.b16 %v48
    %v119 = vunpack.c.l.b16 %v49
    %v120 = vunpack.c.l.b16 %v50
    %v121 = vunpack.c.l.b16 %v51
    %v122 = vunpack.c.l.b16 %v52
    %v123 = vunpack.c.l.b16 %v53
    %v124 = vunpack.c.l.b16 %v54
    %v125 = vunpack.c.l.b16 %v55
    %v126 = vunpack.c.l.b16 %v56
    %v127 = vunpack.c.l.b16 %v57
    %v128 = vunpack.c.l.b16 %v58
    %v129 = vunpack.c.l.b16 %v59
    %v130 = vunpack.c.l.b16 %v60
    %v131 = vpack.c.b16 %v116, %v115
    %v132 = vpack.c.b16 %v118, %v117
    %v133 = vpack.c.b16 %v120, %v119
    %v134 = vpack.c.b16 %v122, %v121
    %v135 = vpack.c.b16 %v124, %v123
    %v136 = vpack.c.b16 %v126, %v125
    %v137 = vpack.c.b16 %v128, %v127
    %v138 = vpack.c.b16 %v130, %v129
    %147 = vmatprep.subr.bf16.mxu0 0
    %148 = vmatpush1.bf16.msra.mxu0 %v138
    %149 = vmatprep.subr.bf16.mxu0 0
    %150 = vmatpush1.bf16.msra.mxu0 %v137
    %151 = vmatprep.subr.bf16.mxu0 0
    %152 = vmatpush1.bf16.msra.mxu0 %v136
    %153 = vmatprep.subr.bf16.mxu0 0
    %154 = vmatpush1.bf16.msra.mxu0 %v135
    %155 = vmatprep.subr.bf16.mxu0 0
    %156 = vmatpush1.bf16.msra.mxu0 %v134
    %157 = vmatprep.subr.bf16.mxu0 0
    %158 = vmatpush1.bf16.msra.mxu0 %v133
    %159 = vmatprep.subr.bf16.mxu0 0
    %160 = vmatpush1.bf16.msra.mxu0 %v132
    %161 = vmatprep.subr.bf16.mxu0 0
    %162 = vmatpush1.bf16.msra.mxu0 %v131
    %163 = vmatprep.subr.bf16.mxu0 0
    %164 = vmatpush2.bf16.msra.mxu0 0
    %165 = vmatprep.subr.bf16.mxu0 0
    %166 = vmatpush2.bf16.msra.mxu0 0
    %167 = vmatprep.subr.bf16.mxu0 0
    %168 = vmatpush2.bf16.msra.mxu0 0
    %169 = vmatprep.subr.bf16.mxu0 0
    %170 = vmatpush2.bf16.msra.mxu0 0
    %171 = vmatprep.subr.bf16.mxu0 0
    %172 = vmatpush2.bf16.msra.mxu0 0
    %173 = vmatprep.subr.bf16.mxu0 0
    %174 = vmatpush2.bf16.msra.mxu0 0
    %175 = vmatprep.subr.bf16.mxu0 0
    %176 = vmatpush2.bf16.msra.mxu0 0
    %177 = vmatprep.subr.bf16.mxu0 0
    %178 = vmatpush2.bf16.msra.mxu0 0
    %179 = vmatprep.mubr.bf16.mxu0 0
    %180 = vmatmul.mubr.bf16.gmra.mxu0 %v97
    %v181 = vpop.f32.mrf.mxu0
    %v182 = vadd.f32 0.0, %v181
    %v183 = vpop.f32.mrf.mxu0
    %v184 = vpop.f32.mrf.mxu0
    %v185 = vadd.f32 0.0, %v184
    %v186 = vpop.f32.mrf.mxu0
    %187 = vdwg.mxu0
    %v188 = vmax.f32 %v182, 0.0
    %v189 = vmax.f32 %v185, 0.0
    %v190 = vpack.c.bf16 %v189, %v188
    %v207 = vunpack.c.l.b16 %v61
    %v208 = vunpack.c.l.b16 %v62
    %v209 = vunpack.c.l.b16 %v63
    %v210 = vunpack.c.l.b16 %v64
    %v211 = vunpack.c.l.b16 %v65
    %v212 = vunpack.c.l.b16 %v66
    %v213 = vunpack.c.l.b16 %v67
    %v214 = vunpack.c.l.b16 %v68
    %v215 = vunpack.c.l.b16 %v69
    %v216 = vunpack.c.l.b16 %v70
    %v217 = vunpack.c.l.b16 %v71
    %v218 = vunpack.c.l.b16 %v72
    %v219 = vunpack.c.l.b16 %v73
    %v220 = vunpack.c.l.b16 %v74
    %v221 = vunpack.c.l.b16 %v75
    %v222 = vunpack.c.l.b16 %v76
    %v223 = vpack.c.b16 %v208, %v207
    %v224 = vpack.c.b16 %v210, %v209
    %v225 = vpack.c.b16 %v212, %v211
    %v226 = vpack.c.b16 %v214, %v213
    %v227 = vpack.c.b16 %v216, %v215
    %v228 = vpack.c.b16 %v218, %v217
    %v229 = vpack.c.b16 %v220, %v219
    %v230 = vpack.c.b16 %v222, %v221
    %239 = vmatprep.subr.bf16.mxu0 0
    %240 = vmatpush1.bf16.msra.mxu0 %v230
    %241 = vmatprep.subr.bf16.mxu0 0
    %242 = vmatpush1.bf16.msra.mxu0 %v229
    %243 = vmatprep.subr.bf16.mxu0 0
    %244 = vmatpush1.bf16.msra.mxu0 %v228
    %245 = vmatprep.subr.bf16.mxu0 0
    %246 = vmatpush1.bf16.msra.mxu0 %v227
    %247 = vmatprep.subr.bf16.mxu0 0
    %248 = vmatpush1.bf16.msra.mxu0 %v226
    %249 = vmatprep.subr.bf16.mxu0 0
    %250 = vmatpush1.bf16.msra.mxu0 %v225
    %251 = vmatprep.subr.bf16.mxu0 0
    %252 = vmatpush1.bf16.msra.mxu0 %v224
    %253 = vmatprep.subr.bf16.mxu0 0
    %254 = vmatpush1.bf16.msra.mxu0 %v223
    %255 = vmatprep.subr.bf16.mxu0 0
    %256 = vmatpush2.bf16.msra.mxu0 0
    %257 = vmatprep.subr.bf16.mxu0 0
    %258 = vmatpush2.bf16.msra.mxu0 0
    %259 = vmatprep.subr.bf16.mxu0 0
    %260 = vmatpush2.bf16.msra.mxu0 0
    %261 = vmatprep.subr.bf16.mxu0 0
    %262 = vmatpush2.bf16.msra.mxu0 0
    %263 = vmatprep.subr.bf16.mxu0 0
    %264 = vmatpush2.bf16.msra.mxu0 0
    %265 = vmatprep.subr.bf16.mxu0 0
    %266 = vmatpush2.bf16.msra.mxu0 0
    %267 = vmatprep.subr.bf16.mxu0 0
    %268 = vmatpush2.bf16.msra.mxu0 0
    %269 = vmatprep.subr.bf16.mxu0 0
    %270 = vmatpush2.bf16.msra.mxu0 0
    %271 = vmatprep.mubr.bf16.mxu0 0
    %272 = vmatmul.mubr.bf16.gmra.mxu0 %v190
    %v273 = vpop.f32.mrf.mxu0
    %v274 = vadd.f32 0.0, %v273
    %v275 = vpop.f32.mrf.mxu0
    %v276 = vpop.f32.mrf.mxu0
    %v277 = vadd.f32 0.0, %v276
    %v278 = vpop.f32.mrf.mxu0
    %279 = vdwg.mxu0
    %v280 = vmax.f32 %v274, 0.0
    %v281 = vmax.f32 %v277, 0.0
    %v282 = vpack.c.bf16 %v281, %v280
    %v299 = vunpack.c.l.b16 %v77
    %v300 = vunpack.c.l.b16 %v78
    %v301 = vunpack.c.l.b16 %v79
    %v302 = vunpack.c.l.b16 %v80
    %v303 = vunpack.c.l.b16 %v81
    %v304 = vunpack.c.l.b16 %v82
    %v305 = vunpack.c.l.b16 %v83
    %v306 = vunpack.c.l.b16 %v84
    %v307 = vunpack.c.l.b16 %v85
    %v308 = vunpack.c.l.b16 %v86
    %v309 = vunpack.c.l.b16 %v87
    %v310 = vunpack.c.l.b16 %v88
    %v311 = vunpack.c.l.b16 %v89
    %v312 = vunpack.c.l.b16 %v90
    %v313 = vunpack.c.l.b16 %v91
    %v314 = vunpack.c.l.b16 %v92
    %v315 = vpack.c.b16 %v300, %v299
    %v316 = vpack.c.b16 %v302, %v301
    %v317 = vpack.c.b16 %v304, %v303
    %v318 = vpack.c.b16 %v306, %v305
    %v319 = vpack.c.b16 %v308, %v307
    %v320 = vpack.c.b16 %v310, %v309
    %v321 = vpack.c.b16 %v312, %v311
    %v322 = vpack.c.b16 %v314, %v313
    %331 = vmatprep.subr.bf16.mxu0 0
    %332 = vmatpush1.bf16.msra.mxu0 %v322
    %333 = vmatprep.subr.bf16.mxu0 0
    %334 = vmatpush1.bf16.msra.mxu0 %v321
    %335 = vmatprep.subr.bf16.mxu0 0
    %336 = vmatpush1.bf16.msra.mxu0 %v320
    %337 = vmatprep.subr.bf16.mxu0 0
    %338 = vmatpush1.bf16.msra.mxu0 %v319
    %339 = vmatprep.subr.bf16.mxu0 0
    %340 = vmatpush1.bf16.msra.mxu0 %v318
    %341 = vmatprep.subr.bf16.mxu0 0
    %342 = vmatpush1.bf16.msra.mxu0 %v317
    %343 = vmatprep.subr.bf16.mxu0 0
    %344 = vmatpush1.bf16.msra.mxu0 %v316
    %345 = vmatprep.subr.bf16.mxu0 0
    %346 = vmatpush1.bf16.msra.mxu0 %v315
    %347 = vmatprep.subr.bf16.mxu0 0
    %348 = vmatpush2.bf16.msra.mxu0 0
    %349 = vmatprep.subr.bf16.mxu0 0
    %350 = vmatpush2.bf16.msra.mxu0 0
    %351 = vmatprep.subr.bf16.mxu0 0
    %352 = vmatpush2.bf16.msra.mxu0 0
    %353 = vmatprep.subr.bf16.mxu0 0
    %354 = vmatpush2.bf16.msra.mxu0 0
    %355 = vmatprep.subr.bf16.mxu0 0
    %356 = vmatpush2.bf16.msra.mxu0 0
    %357 = vmatprep.subr.bf16.mxu0 0
    %358 = vmatpush2.bf16.msra.mxu0 0
    %359 = vmatprep.subr.bf16.mxu0 0
    %360 = vmatpush2.bf16.msra.mxu0 0
    %361 = vmatprep.subr.bf16.mxu0 0
    %362 = vmatpush2.bf16.msra.mxu0 0
    %363 = vmatprep.mubr.bf16.mxu0 0
    %364 = vmatmul.mubr.bf16.gmra.mxu0 %v282
    %v365 = vpop.f32.mrf.mxu0
    %v366 = vadd.f32 0.0, %v365
    %v367 = vpop.f32.mrf.mxu0
    %v368 = vpop.f32.mrf.mxu0
    %v369 = vadd.f32 0.0, %v368
    %v370 = vpop.f32.mrf.mxu0
    %371 = vdwg.mxu0
    %vm372 = vcmask 15360
    %373 = vst.msk [vmem:[%s2] sm:$0xff] %vm372, %v366
    %374 = vst.msk [vmem:[%s2 + $0x8] sm:$0xff] %vm372, %v369
    // Predicated region
    $region14: #{dqn_forward.1} parent=1 // pred_check
      _
    $region15: #{dqn_forward.1} parent=1 // pred_check_branch
      %376 = sbr.rel (0) target = $region17
    $region16: #{dqn_forward.1} parent=1 // pred_region
      _
    $region17: #{dqn_forward.1} parent=1 // pred_fallthru
      _
    // Predicated region
    $region18: #{dqn_forward.1} parent=1 // pred_check
      _
    $region19: #{dqn_forward.1} parent=1 // pred_check_branch
      %378 = sbr.rel (0) target = $region21
    $region20: #{dqn_forward.1} parent=1 // pred_region
      _
    $region21: #{dqn_forward.1} parent=1 // pred_fallthru
      _
    %379 = vsyncpa [#allocation4], 1

</llo_original>
